<compile_context>
chip_gen: v7x
topology: tpu7x:2x2x1
jax: 0.10.0
libtpu: 0.0.40
codegen_flags: <defaults>
</compile_context>

<pallas_src>
import jax
import jax.numpy as jnp
from jax.experimental import pallas as pl
from jax.experimental.pallas import tpu as pltpu


def _round_up(x, m):
    return (x + m - 1) // m * m


def _focus_conv_kernel(x_ref, w_ref, b_ref, o_ref):
    """One (batch, spatial-tile) step of the fused conv + eval-BN + SiLU.

    x_ref: (1, K, tile_s)    channels-first patch slab (mxu dtype)
    w_ref: (cout, K)         BN-scale-folded im2col weights (mxu dtype), resident
    b_ref: (cout, 1)         BN bias (f32), resident
    o_ref: (1, cout, tile_s) output tile (final dtype), lane-dense spatial
    """
    acc = jnp.dot(w_ref[...], x_ref[0], preferred_element_type=jnp.float32)
    y = acc + b_ref[...]                       # (cout,1) broadcasts over lanes
    o_ref[0] = (y * jax.nn.sigmoid(y)).astype(o_ref.dtype)


def focus_forward(x_nchw, weight, gamma, beta, running_mean, running_var, *,
                  stride=1, eps=1e-5, mxu_dtype=jnp.bfloat16, out_dtype=None,
                  tile_spatial=8192):
    """Focus forward: conv_bn_silu(space_to_depth(x)).  groups=1, bias=False.

    x_nchw: (N, Cin, H, W) float32
    weight: (Cout, 4*Cin, k, k) float32 (PyTorch conv layout)
    Returns NCHW, dtype = out_dtype (default: x dtype).
    """
    n, cin, h, w = x_nchw.shape
    assert h % 2 == 0 and w % 2 == 0, "Focus requires even spatial dims"
    cout, c4, kh, kw = weight.shape
    assert c4 == 4 * cin
    pad = (kh - 1) // 2
    h2, w2 = h // 2, w // 2
    ho = (h2 + 2 * pad - kh) // stride + 1
    wo = (w2 + 2 * pad - kw) // stride + 1
    out_dtype = x_nchw.dtype if out_dtype is None else out_dtype

    # ---- space-to-depth, channels-first, fused into ONE transpose ----------
    # channel order = torch.cat((TL, BL, TR, BR), dim=1): c4 = (2*wi+hi)*cin + c
    x6 = x_nchw.reshape(n, cin, h2, 2, w2, 2)          # (n, c, h2, hi, w2, wi)
    xcf = jnp.transpose(x6, (0, 5, 3, 1, 2, 4)).reshape(n, c4, h2, w2)
    xcf = xcf.astype(mxu_dtype)

    # ---- im2col (identity / free reshape for the default k=1, stride=1) ----
    if kh == 1 and kw == 1 and stride == 1:
        k_dim = c4
        patches = xcf.reshape(n, c4, h2 * w2)          # free HBM reshape
    else:
        # TODO(synk): wrapper-side im2col materializes a kh*kw-inflated slab
        # in HBM; an in-kernel halo-DMA variant would remove that traffic.
        if pad > 0:
            xcf = jnp.pad(xcf, ((0, 0), (0, 0), (pad, pad), (pad, pad)))
        taps = []
        for di in range(kh):
            for dj in range(kw):
                taps.append(jax.lax.slice(
                    xcf, (0, 0, di, dj),
                    (n, c4, di + stride * (ho - 1) + 1,
                     dj + stride * (wo - 1) + 1),
                    (1, 1, stride, stride)))
        k_dim = kh * kw * c4
        patches = jnp.concatenate(taps, axis=1).reshape(n, k_dim, ho * wo)

    s = ho * wo

    # ---- weights: (Cout, K) im2col matrix with eval-BN scale folded in -----
    scale = (gamma / jnp.sqrt(running_var + eps)).astype(jnp.float32)
    bias = (beta - running_mean * scale).astype(jnp.float32)
    w2d = jnp.transpose(weight, (0, 2, 3, 1)).reshape(cout, k_dim)
    w2d = (w2d.astype(jnp.float32) * scale[:, None]).astype(mxu_dtype)
    bias2d = bias.reshape(cout, 1)

    # ---- spatial tiling: big lane-dense tiles, output buffer ~<= 3 MiB -----
    out_bytes = jnp.dtype(out_dtype).itemsize
    in_bytes = jnp.dtype(mxu_dtype).itemsize
    cap = (3 << 20) // (max(cout, 8) * out_bytes)
    cap = max(128, (min(int(tile_spatial), cap) // 128) * 128)
    if s <= cap:
        tile_s, sp = s, s                     # single tile per image (legal:
    else:                                     # block dim == full array dim)
        tile_s = 0
        t = cap
        while t >= 128:                       # prefer a 128-multiple divisor
            if s % t == 0:
                tile_s = t
                break
            t -= 128
        if tile_s == 0:                       # no divisor: pad spatial extent
            tile_s = cap
        sp = _round_up(s, tile_s)
    if sp != s:
        patches = jnp.pad(patches, ((0, 0), (0, 0), (0, sp - s)))

    kp = _round_up(k_dim, 8)
    coutp = _round_up(cout, 8)
    vmem_est = (2 * kp * tile_s * in_bytes            # double-buffered input
                + 2 * coutp * tile_s * out_bytes      # double-buffered output
                + coutp * tile_s * 4                  # f32 accumulator temp
                + coutp * kp * in_bytes + coutp * 4   # resident weights / bias
                + (1 << 20))
    vmem_limit = int(min(max(2 * vmem_est, 16 << 20), 48 << 20))

    cost = pl.CostEstimate(
        flops=2 * n * s * k_dim * cout,
        transcendentals=n * s * cout,
        bytes_accessed=(n * k_dim * sp * in_bytes
                        + cout * k_dim * in_bytes
                        + n * cout * sp * out_bytes))

    out = pl.pallas_call(
        _focus_conv_kernel,
        out_shape=jax.ShapeDtypeStruct((n, cout, sp), out_dtype),
        grid_spec=pltpu.PrefetchScalarGridSpec(
            num_scalar_prefetch=0,
            grid=(n, sp // tile_s),
            in_specs=[
                pl.BlockSpec((1, k_dim, tile_s), lambda b, i: (b, 0, i)),
                pl.BlockSpec((cout, k_dim), lambda b, i: (0, 0)),   # resident
                pl.BlockSpec((cout, 1), lambda b, i: (0, 0)),       # resident
            ],
            out_specs=pl.BlockSpec((1, cout, tile_s), lambda b, i: (b, 0, i)),
        ),
        compiler_params=pltpu.CompilerParams(
            dimension_semantics=("parallel", "parallel"),
            vmem_limit_bytes=vmem_limit),
        cost_estimate=cost,
    )(patches, w2d, bias2d)

    if sp != s:
        out = out[:, :, :s]
    # output is already channels-first -> NCHW via a free reshape (no transpose)
    return out.reshape(n, cout, ho, wo)


def _reference_focus(x, weight, gamma, beta, mean, var, *, stride=1, eps=1e-5):
    """Pure-JAX replica of the PyTorch Focus forward (eval-mode BN)."""
    tl = x[..., ::2, ::2]
    tr = x[..., ::2, 1::2]
    bl = x[..., 1::2, ::2]
    br = x[..., 1::2, 1::2]
    xf = jnp.concatenate([tl, bl, tr, br], axis=1)
    k = weight.shape[2]
    pad = (k - 1) // 2
    y = jax.lax.conv_general_dilated(
        xf, weight, window_strides=(stride, stride),
        padding=((pad, pad), (pad, pad)),
        dimension_numbers=("NCHW", "OIHW", "NCHW"),
        precision=jax.lax.Precision.HIGHEST)
    scale = gamma / jnp.sqrt(var + eps)
    bias = beta - mean * scale
    y = y * scale[None, :, None, None] + bias[None, :, None, None]
    return y * jax.nn.sigmoid(y)


if __name__ == "__main__":
    key = jax.random.PRNGKey(0)
    n, cin, h, w = 2, 4, 16, 16

    configs = [
        (8, 1, 1),    # Focus defaults: kernel_size=1, stride=1
        (16, 3, 1),   # YOLOX-style Focus with ksize=3
    ]
    for cout, ksize, stride in configs:
        kx, kw_, kg, kb, km, kv = jax.random.split(
            jax.random.fold_in(key, ksize), 6)
        x = jax.random.normal(kx, (n, cin, h, w), dtype=jnp.float32)
        fan_in = 4 * cin * ksize * ksize
        weight = jax.random.normal(kw_, (cout, 4 * cin, ksize, ksize),
                                   jnp.float32) / jnp.sqrt(fan_in)
        gamma = 1.0 + 0.1 * jax.random.normal(kg, (cout,), jnp.float32)
        beta = 0.1 * jax.random.normal(kb, (cout,), jnp.float32)
        running_mean = 0.1 * jax.random.normal(km, (cout,), jnp.float32)
        running_var = 1.0 + 0.1 * jax.random.uniform(kv, (cout,), jnp.float32)

        ref = _reference_focus(x, weight, gamma, beta, running_mean,
                               running_var, stride=stride)

        # f32 MXU path: tight check against the PyTorch-equivalent reference.
        out_f32 = jax.block_until_ready(
            focus_forward(x, weight, gamma, beta, running_mean, running_var,
                          stride=stride, mxu_dtype=jnp.float32))
        assert out_f32.shape == ref.shape == (n, cout, h // 2, w // 2)
        assert out_f32.dtype == x.dtype
        assert jnp.allclose(out_f32, ref, atol=1e-3, rtol=1e-3), \
            f"f32 mismatch vs reference (k={ksize})"

        # bf16 MXU path (performance default): loose check (bf16 rounding).
        out_bf16 = jax.block_until_ready(
            focus_forward(x, weight, gamma, beta, running_mean, running_var,
                          stride=stride, mxu_dtype=jnp.bfloat16))
        assert jnp.allclose(out_bf16, ref, atol=5e-2, rtol=5e-2), \
            f"bf16 mismatch vs reference (k={ksize})"

        # bf16 output dtype (halves output HBM traffic for bf16 consumers).
        out_lo = jax.block_until_ready(
            focus_forward(x, weight, gamma, beta, running_mean, running_var,
                          stride=stride, mxu_dtype=jnp.bfloat16,
                          out_dtype=jnp.bfloat16))
        assert out_lo.dtype == jnp.bfloat16
        assert jnp.allclose(out_lo.astype(jnp.float32), ref,
                            atol=7e-2, rtol=7e-2), \
            f"bf16-out mismatch vs reference (k={ksize})"

    print("KERNEL_OK")
</pallas_src>

<mosaic_0001>
module attributes {stable_mosaic.version = 11 : i64} {
  func.func @_focus_conv_kernel(%arg0: i32, %arg1: i32, %arg2: memref<1x16x64xf32, #tpu.memory_space<vmem>>, %arg3: memref<8x16xf32, #tpu.memory_space<vmem>>, %arg4: memref<8x1xf32, #tpu.memory_space<vmem>>, %arg5: memref<1x8x64xf32, #tpu.memory_space<vmem>>) attributes {dimension_semantics = [#tpu.dimension_semantics<parallel>, #tpu.dimension_semantics<parallel>], iteration_bounds = array<i64: 2, 1>, scalar_prefetch = 0 : i64, scratch_operands = 0 : i64, tpu.core_type = #tpu.core_type<tc>, window_params = [{transform_indices = @transform_0, window_bounds = array<i64: 1, 16, 64>}, {pipeline_mode = #tpu.pipeline_mode<synchronous>, transform_indices = @transform_1, window_bounds = array<i64: 8, 16>}, {pipeline_mode = #tpu.pipeline_mode<synchronous>, transform_indices = @transform_2, window_bounds = array<i64: 8, 1>}, {transform_indices = @transform_3, window_bounds = array<i64: 1, 8, 64>}]} {
    %c0 = arith.constant 0 : index
    %c0_0 = arith.constant 0 : index
    %0 = vector.load %arg3[%c0, %c0_0] : memref<8x16xf32, #tpu.memory_space<vmem>>, vector<8x16xf32>
    %c0_1 = arith.constant 0 : index
    %c0_2 = arith.constant 0 : index
    %c0_3 = arith.constant 0 : index
    %1 = vector.load %arg2[%c0_1, %c0_2, %c0_3] : memref<1x16x64xf32, #tpu.memory_space<vmem>>, vector<1x16x64xf32>
    %2 = vector.shape_cast %1 : vector<1x16x64xf32> to vector<16x64xf32>
    %cst = arith.constant dense<0.000000e+00> : vector<8x64xf32>
    %3 = tpu.matmul %0, %2, %cst {dimension_numbers = #tpu.dot_dimension_numbers<[1], [0], [0], [1], [0, 0, 1, 1], [], []>} : vector<8x16xf32>, vector<16x64xf32>, vector<8x64xf32> -> vector<8x64xf32>
    %c0_4 = arith.constant 0 : index
    %c0_5 = arith.constant 0 : index
    %4 = vector.load %arg4[%c0_4, %c0_5] : memref<8x1xf32, #tpu.memory_space<vmem>>, vector<8x1xf32>
    %5 = vector.broadcast %4 : vector<8x1xf32> to vector<8x64xf32>
    %6 = arith.addf %3, %5 : vector<8x64xf32>
    %7 = arith.negf %6 : vector<8x64xf32>
    %8 = math.exp %7 : vector<8x64xf32>
    %cst_6 = arith.constant 1.000000e+00 : f32
    %9 = vector.broadcast %cst_6 : f32 to vector<8x64xf32>
    %10 = arith.addf %9, %8 : vector<8x64xf32>
    %11 = arith.divf %9, %10 : vector<8x64xf32>
    %12 = arith.mulf %6, %11 : vector<8x64xf32>
    %c0_7 = arith.constant 0 : index
    %c0_8 = arith.constant 0 : index
    %c0_9 = arith.constant 0 : index
    %13 = vector.load %arg5[%c0_7, %c0_8, %c0_9] : memref<1x8x64xf32, #tpu.memory_space<vmem>>, vector<1x8x64xf32>
    %14 = vector.shape_cast %13 : vector<1x8x64xf32> to vector<8x64xf32>
    %15 = vector.shape_cast %12 : vector<8x64xf32> to vector<1x8x64xf32>
    tpu.vector_store %arg5[%c0_7, %c0_8, %c0_9], %15 {strides = array<i32>} : memref<1x8x64xf32, #tpu.memory_space<vmem>>, vector<1x8x64xf32>,
    return
  }
  func.func @transform_0(%arg0: i32, %arg1: i32) -> (i32, i32, i32) {
    %c0_i32 = arith.constant 0 : i32
    %c0_i32_0 = arith.constant 0 : i32
    return %arg0, %c0_i32, %arg1 : i32, i32, i32
  }
  func.func @transform_1(%arg0: i32, %arg1: i32) -> (i32, i32) {
    %c0_i32 = arith.constant 0 : i32
    %c0_i32_0 = arith.constant 0 : i32
    %c0_i32_1 = arith.constant 0 : i32
    return %c0_i32, %c0_i32_0 : i32, i32
  }
  func.func @transform_2(%arg0: i32, %arg1: i32) -> (i32, i32) {
    %c0_i32 = arith.constant 0 : i32
    %c0_i32_0 = arith.constant 0 : i32
    %c0_i32_1 = arith.constant 0 : i32
    return %c0_i32, %c0_i32_0 : i32, i32
  }
  func.func @transform_3(%arg0: i32, %arg1: i32) -> (i32, i32, i32) {
    %c0_i32 = arith.constant 0 : i32
    %c0_i32_0 = arith.constant 0 : i32
    return %arg0, %c0_i32, %arg1 : i32, i32, i32
  }
}

</mosaic_0001>

<llo_original>
// kernel: tpu_custom_call.1
$region0: #{tpu_custom_call.1}
  #allocation0 [shape = 'u32[]', space=smem, size = 0x4, offset = 0x4, fixed_abs, tag = 'smem constant byte address 0x4 - core index']
  #allocation1 [shape = 'u32[144,128]{1,0:T(1,128)}', space=vmem, size = 0x12000, scoped, tag = 'internal scratch']
  %s0 = inlined_call_operand.hbm [shape: f32[2,16,64], index: 0, kind: input, shape index: {}]
  %s1 = inlined_call_operand.vmem [shape: f32[8,16], index: 1, kind: input, shape index: {}]
  %s2 = inlined_call_operand.vmem [shape: f32[8,1], index: 2, kind: input, shape index: {}]
  %s3 = inlined_call_operand.hbm [shape: f32[2,8,64], index: 3, kind: output, shape index: {}]
  %s4 = sld [smem:[#allocation0]]
  $region49: #{tpu_custom_call.1} parent=0
    _
  %s6 = ssub.s32 1, %s4
  %s7 = scalar_select 0, %s6, %s4
  $region1: #{tpu_custom_call.1} parent=0
    #allocation2 [shape = 'u8[16384]{0}', space=vmem, size = 0x4000, scoped, tag = 'input window, operand 0']
    #allocation3 [shape = 's32[2]{0}', space=sflag, size = 0x8, scoped, tag = 'scoped memory for tpu_custom_call.1']
    #allocation4 [shape = 's32[2]{0}', space=sflag, size = 0x8, scoped, tag = 'scoped memory for tpu_custom_call.1']
    #allocation5 [shape = 'u8[8192]{0}', space=vmem, size = 0x2000, scoped, tag = 'output window, operand 0']
    %8 = vsyncpa [#allocation3], 0
    %s9 = scalar_lea.sflag [#allocation3], 1
    %10 = vsyncpa %s9, 0
    %11 = vsyncpa [#allocation4], 0
    %s12 = scalar_lea.sflag [#allocation4], 1
    %13 = vsyncpa %s12, 0
    loop: start=0, step=1, limit=4
    $region2: #{tpu_custom_call.1} parent=1 // loop_pre_header
      _
    $region3: #{tpu_custom_call.1} parent=1 // loop_header
      %s15 = sphi 0, %s19
      %p16 = scmp.ge.s32.totalorder %s15, 4
      %s22 = sphi 0, %s34
      %s23 = sphi 0, %s30
      %s24 = sphi 0, %s22
      %s25 = sphi 0, %s23
      %s26 = sphi 0, %s24
      %s27 = sphi 0, %s25
      %s39 = sphi 0, %s41
      %s42 = sphi 0, %s39
      %s43 = sphi 0, %s42
      %s59 = sphi 0, %s43
      %s63 = sphi 0, %s63
      %s65 = sphi 0, %s63
      %s66 = sphi 0, %s65
      %s80 = sphi 0, %s66
      %s84 = sphi 0, %s84
      %s86 = sphi 0, %s84
      %s87 = sphi 0, %s86
      %s101 = sphi 0, %s87
      %s109 = sphi 0, %s111
      %s112 = sphi 0, %s109
      %s113 = sphi 0, %s112
      %s129 = sphi 0, %s113
    $region4: #{tpu_custom_call.1} parent=1 // loop_header_branch
      %18 = sbr.rel (%p16) target = $region8
    $region5: #{tpu_custom_call.1} parent=1 // loop_body
      %s20 = ssub.s32 %s15, 1
      %s21 = ssub.s32 %s15, 2
      %s28 = sadd.s32 1, %s23
      %p29 = scmp.ge.s32.totalorder %s28, 1
      %s30 = scalar_select %p29, 0, %s28
      %s31 = sadd.s32 1, %s22
      %s32 = scalar_select %p29, %s31, %s22
      %p33 = scmp.ge.s32.totalorder %s32, 2
      %s34 = scalar_select %p33, 0, %s32
      %s35 = ssub.s32 %s22, %s34
      %s36 = ssub.s32 %s23, %s30
      %s37 = sor.u32 %s35, %s36
      %p38 = scmp.eq.s32.totalorder %s37, 0
      %s40 = sadd.s32 %s39, 1
      %s41 = scalar_select %p38, %s39, %s40
      %p44 = pneg %p38
      %p45 = scmp.eq.s32.totalorder %s15, 1
      %p46 = por %p44, %p45
      %p47 = scmp.ne.s32.totalorder %s39, %s42
      %p48 = scmp.eq.s32.totalorder %s15, 0
      %p49 = por %p47, %p48
      %p50 = scmp.ne.s32.totalorder %s39, %s42
      %p51 = scmp.eq.s32.totalorder %s20, 1
      %p52 = por %p50, %p51
      %p53 = scmp.ne.s32.totalorder %s42, %s43
      %p54 = scmp.eq.s32.totalorder %s20, 0
      %p55 = por %p53, %p54
      %p56 = scmp.ne.s32.totalorder %s42, %s43
      %p57 = scmp.eq.s32.totalorder %s21, 1
      %p58 = por %p56, %p57
      %p60 = scmp.ne.s32.totalorder %s43, %s59
      %p61 = scmp.eq.s32.totalorder %s21, 0
      %p62 = por %p60, %p61
      %s64 = sadd.s32 %s63, 1
      %p67 = scmp.eq.s32.totalorder %s15, 1
      %p68 = scmp.ne.s32.totalorder %s63, %s65
      %p69 = scmp.eq.s32.totalorder %s15, 0
      %p70 = por %p68, %p69
      %p71 = scmp.ne.s32.totalorder %s63, %s65
      %p72 = scmp.eq.s32.totalorder %s20, 1
      %p73 = por %p71, %p72
      %p74 = scmp.ne.s32.totalorder %s65, %s66
      %p75 = scmp.eq.s32.totalorder %s20, 0
      %p76 = por %p74, %p75
      %p77 = scmp.ne.s32.totalorder %s65, %s66
      %p78 = scmp.eq.s32.totalorder %s21, 1
      %p79 = por %p77, %p78
      %p81 = scmp.ne.s32.totalorder %s66, %s80
      %p82 = scmp.eq.s32.totalorder %s21, 0
      %p83 = por %p81, %p82
      %s85 = sadd.s32 %s84, 1
      %p88 = scmp.eq.s32.totalorder %s15, 1
      %p89 = scmp.ne.s32.totalorder %s84, %s86
      %p90 = scmp.eq.s32.totalorder %s15, 0
      %p91 = por %p89, %p90
      %p92 = scmp.ne.s32.totalorder %s84, %s86
      %p93 = scmp.eq.s32.totalorder %s20, 1
      %p94 = por %p92, %p93
      %p95 = scmp.ne.s32.totalorder %s86, %s87
      %p96 = scmp.eq.s32.totalorder %s20, 0
      %p97 = por %p95, %p96
      %p98 = scmp.ne.s32.totalorder %s86, %s87
      %p99 = scmp.eq.s32.totalorder %s21, 1
      %p100 = por %p98, %p99
      %p102 = scmp.ne.s32.totalorder %s87, %s101
      %p103 = scmp.eq.s32.totalorder %s21, 0
      %p104 = por %p102, %p103
      %s105 = ssub.s32 %s22, %s34
      %s106 = ssub.s32 %s23, %s30
      %s107 = sor.u32 %s105, %s106
      %p108 = scmp.eq.s32.totalorder %s107, 0
      %s110 = sadd.s32 %s109, 1
      %s111 = scalar_select %p108, %s109, %s110
      %p114 = pneg %p108
      %p115 = scmp.eq.s32.totalorder %s15, 1
      %p116 = por %p114, %p115
      %p117 = scmp.ne.s32.totalorder %s109, %s112
      %p118 = scmp.eq.s32.totalorder %s15, 0
      %p119 = por %p117, %p118
      %p120 = scmp.ne.s32.totalorder %s109, %s112
      %p121 = scmp.eq.s32.totalorder %s20, 1
      %p122 = por %p120, %p121
      %p123 = scmp.ne.s32.totalorder %s112, %s113
      %p124 = scmp.eq.s32.totalorder %s20, 0
      %p125 = por %p123, %p124
      %p126 = scmp.ne.s32.totalorder %s112, %s113
      %p127 = scmp.eq.s32.totalorder %s21, 1
      %p128 = por %p126, %p127
      %p130 = scmp.ne.s32.totalorder %s113, %s129
      %p131 = scmp.eq.s32.totalorder %s21, 0
      %p132 = por %p130, %p131
      %p133 = scmp.le.s32.totalorder 1, %s15
      %p134 = scmp.lt.s32.totalorder %s15, 3
      %p135 = pnand %p133, %p134
      %p136 = pneg %p135
      // Predicated region
      $region9: #{tpu_custom_call.1} parent=5 // pred_check
        _
      $region10: #{tpu_custom_call.1} parent=5 // pred_check_branch
        %138 = sbr.rel (%p135) target = $region12
      $region11: #{tpu_custom_call.1} parent=5 // pred_region
        %s139 = ssub.s32 %s15, 1
        // Predicated region
        $region13: #{tpu_custom_call.1} parent=11 // pred_check
          %p140 = pneg %p76
        $region14: #{tpu_custom_call.1} parent=11 // pred_check_branch
          %142 = sbr.rel (%p140) target = $region16
        $region15: #{tpu_custom_call.1} parent=11 // pred_region
          _
        $region16: #{tpu_custom_call.1} parent=11 // pred_fallthru
          _
        // Predicated region
        $region17: #{tpu_custom_call.1} parent=11 // pred_check
          %p143 = pneg %p97
        $region18: #{tpu_custom_call.1} parent=11 // pred_check_branch
          %145 = sbr.rel (%p143) target = $region20
        $region19: #{tpu_custom_call.1} parent=11 // pred_region
          _
        $region20: #{tpu_custom_call.1} parent=11 // pred_fallthru
          _
      $region12: #{tpu_custom_call.1} parent=5 // pred_fallthru
        _
      %p146 = scmp.lt.s32.totalorder %s15, 2
      // Predicated region
      $region21: #{tpu_custom_call.1} parent=5 // pred_check
        %p147 = pneg %p146
      $region22: #{tpu_custom_call.1} parent=5 // pred_check_branch
        %149 = sbr.rel (%p147) target = $region24
      $region23: #{tpu_custom_call.1} parent=5 // pred_region
        // Predicated region
        $region25: #{tpu_custom_call.1} parent=23 // pred_check
          %p150 = pneg %p49
        $region26: #{tpu_custom_call.1} parent=23 // pred_check_branch
          %152 = sbr.rel (%p150) target = $region28
        $region27: #{tpu_custom_call.1} parent=23 // pred_region
          %s153 = sand.u32 %s39, 1
          %s154 = scalar_lea.sflag [#allocation3], %s153
          %s155 = sand.u32 %s39, 1
          %s156 = smul.addr %s155, 16
          %s157 = scalar_lea.vmem [#allocation2], %s156
          %s159 = ssub.s32 256, 256
          %160 = vsyncadd %s154, %s159
          %s161 = smul.addr %s22, 2
          %s162 = sadd.s32 %s23, %s161
          %s163 = smul.addr %s162, 128
          %s164 = scalar_lea.hbm %s0, %s163
          %s165 = sshll.u32 %s157, 4
          %s166 = int_to_ptr.vmem [resolvable:$true] %s165
          %171 = dma.hbm_to_vmem [thread:$0]  %s164, 256, %s166, %s154, 128, 128, 8
        $region28: #{tpu_custom_call.1} parent=23 // pred_fallthru
          _
      $region24: #{tpu_custom_call.1} parent=5 // pred_fallthru
        _
      %p172 = scmp.le.s32.totalorder 1, %s15
      %p173 = scmp.lt.s32.totalorder %s15, 3
      %p174 = pnand %p172, %p173
      %p175 = pneg %p174
      // Predicated region
      $region29: #{tpu_custom_call.1} parent=5 // pred_check
        _
      $region30: #{tpu_custom_call.1} parent=5 // pred_check_branch
        %177 = sbr.rel (%p174) target = $region32
      $region31: #{tpu_custom_call.1} parent=5 // pred_region
        %s178 = ssub.s32 %s15, 1
        %s179 = sand.u32 %s42, 1
        %s180 = scalar_lea.sflag [#allocation3], %s179
        %s181 = sand.u32 %s42, 1
        %s182 = smul.addr %s181, 16
        %s183 = scalar_lea.vmem [#allocation2], %s182
        // Predicated region
        $region33: #{tpu_custom_call.1} parent=31 // pred_check
          %p184 = pneg %p55
        $region34: #{tpu_custom_call.1} parent=31 // pred_check_branch
          %186 = sbr.rel (%p184) target = $region36
        $region35: #{tpu_custom_call.1} parent=31 // pred_region
          %187 = dma.done %s180, 256
        $region36: #{tpu_custom_call.1} parent=31 // pred_fallthru
          _
        %s188 = sand.u32 %s42, 1
        %s189 = scalar_lea.sflag [#allocation3], %s188
        %s190 = sand.u32 %s42, 1
        %s191 = smul.addr %s190, 16
        %s192 = scalar_lea.vmem [#allocation2], %s191
        %p193 = pneg %p55
        %p194 = pneg %p52
        %p195 = pneg %p76
        %p196 = pneg %p73
        %p197 = pneg %p97
        %p198 = pneg %p94
        %p199 = pneg %p125
        %p200 = pneg %p122
        %s201 = sand.u32 %s112, 1
        %s202 = scalar_lea.sflag [#allocation4], %s201
        %s203 = sand.u32 %s112, 1
        %s204 = smul.addr %s203, 8
        %s205 = scalar_lea.vmem [#allocation5], %s204
        %v206 = vld [vmem:[%s1] sm:$0xff]
        %v207 = vld [vmem:[%s183] sm:$0xff]
        %v208 = vld [vmem:[%s183 + $0x8] sm:$0xff]
        %v209 = vld [vmem:[%s2] sm:$0xff]
        %211 = vset.pattern.permute.xlu0 0
        %212 = vperm.xlu0 %211, %v209
        %v213 = vpop.permute.xlu0 %212
        %vm215 = vcmask 130048
        %v217 = vsel %vm215, %v206, 0
        %219 = vmatprep.subr.mxu0 0.0
        %220 = vmatpush1.msra.mxu0 %v207
        %221 = vmatprep.subr.mxu0 0.0
        %222 = vmatpush1.msra.mxu0 %v208
        %223 = vmatprep.subr.mxu0 0.0
        %224 = vmatpush1.msra.mxu0 0.0
        %225 = vmatprep.subr.mxu0 0.0
        %226 = vmatpush1.msra.mxu0 0.0
        %227 = vmatprep.subr.mxu0 0.0
        %228 = vmatpush1.msra.mxu0 0.0
        %229 = vmatprep.subr.mxu0 0.0
        %230 = vmatpush1.msra.mxu0 0.0
        %231 = vmatprep.subr.mxu0 0.0
        %232 = vmatpush1.msra.mxu0 0.0
        %233 = vmatprep.subr.mxu0 0.0
        %234 = vmatpush1.msra.mxu0 0.0
        %235 = vmatprep.subr.mxu0 0.0
        %236 = vmatpush1.msra.mxu0 0.0
        %237 = vmatprep.subr.mxu0 0.0
        %238 = vmatpush1.msra.mxu0 0.0
        %239 = vmatprep.subr.mxu0 0.0
        %240 = vmatpush1.msra.mxu0 0.0
        %241 = vmatprep.subr.mxu0 0.0
        %242 = vmatpush1.msra.mxu0 0.0
        %243 = vmatprep.subr.mxu0 0.0
        %244 = vmatpush1.msra.mxu0 0.0
        %245 = vmatprep.subr.mxu0 0.0
        %246 = vmatpush1.msra.mxu0 0.0
        %247 = vmatprep.subr.mxu0 0.0
        %248 = vmatpush1.msra.mxu0 0.0
        %249 = vmatprep.subr.mxu0 0.0
        %250 = vmatpush1.msra.mxu0 0.0
        %251 = vmatprep.subr.mxu0 0.0
        %252 = vmatpush1.msra.mxu0 0.0
        %253 = vmatprep.subr.mxu0 0.0
        %254 = vmatpush1.msra.mxu0 0.0
        %255 = vmatprep.subr.mxu0 0.0
        %256 = vmatpush1.msra.mxu0 0.0
        %257 = vmatprep.subr.mxu0 0.0
        %258 = vmatpush1.msra.mxu0 0.0
        %259 = vmatprep.subr.mxu0 0.0
        %260 = vmatpush1.msra.mxu0 0.0
        %261 = vmatprep.subr.mxu0 0.0
        %262 = vmatpush1.msra.mxu0 0.0
        %263 = vmatprep.subr.mxu0 0.0
        %264 = vmatpush1.msra.mxu0 0.0
        %265 = vmatprep.subr.mxu0 0.0
        %266 = vmatpush1.msra.mxu0 0.0
        %267 = vmatprep.subr.mxu0 0.0
        %268 = vmatpush1.msra.mxu0 0.0
        %269 = vmatprep.subr.mxu0 0.0
        %270 = vmatpush1.msra.mxu0 0.0
        %271 = vmatprep.subr.mxu0 0.0
        %272 = vmatpush1.msra.mxu0 0.0
        %273 = vmatprep.subr.mxu0 0.0
        %274 = vmatpush1.msra.mxu0 0.0
        %275 = vmatprep.subr.mxu0 0.0
        %276 = vmatpush1.msra.mxu0 0.0
        %277 = vmatprep.subr.mxu0 0.0
        %278 = vmatpush1.msra.mxu0 0.0
        %279 = vmatprep.subr.mxu0 0.0
        %280 = vmatpush1.msra.mxu0 0.0
        %281 = vmatprep.subr.mxu0 0.0
        %282 = vmatpush1.msra.mxu0 0.0
        %283 = vmatprep.mubr.f32.mxu0 0.0
        %284 = vmatmul.mubr.f32.gmra.mrb[0].mxu0 %v217
        %v285 = vpop.f32.mrb[0].mxu0
        %v286 = vadd.f32 %v213, %v285
        %v287 = vpop.f32.mrb[0].mxu0
        %288 = vdwg.mxu0
        %v289 = vxor.u32 %v286, 2147483648
        %v290 = vmul.f32 %v289, 1.442695
        %v291 = vpow.pop %v290
        %v292 = vadd.f32 %v291, 1.0
        %v293 = vrcp.pop %v292
        %v294 = vmul.f32 1.0, %v293
        %v295 = vmul.f32 %v286, %v294
        %vm296 = vcmask 523264
        %297 = vst.msk [vmem:[%s205] sm:$0xff] %vm296, %v295
        %s298 = sand.u32 %s112, 1
        %s299 = scalar_lea.sflag [#allocation4], %s298
        %s300 = sand.u32 %s112, 1
        %s301 = smul.addr %s300, 8
        %s302 = scalar_lea.vmem [#allocation5], %s301
        // Predicated region
        $region37: #{tpu_custom_call.1} parent=31 // pred_check
          %p303 = pneg %p122
        $region38: #{tpu_custom_call.1} parent=31 // pred_check_branch
          %305 = sbr.rel (%p303) target = $region40
        $region39: #{tpu_custom_call.1} parent=31 // pred_region
          %s307 = ssub.s32 128, 128
          %308 = vsyncadd %s299, %s307
          %s309 = sadd.s32 %s25, %s24
          %s310 = smul.addr %s309, 128
          %s311 = scalar_lea.hbm %s3, %s310
          %s313 = sshll.u32 %s302, 4
          %s314 = int_to_ptr.vmem [resolvable:$true] %s313
          %316 = dma.vmem_to_hbm [thread:$0]  %s314, 128, %s311, %s299
        $region40: #{tpu_custom_call.1} parent=31 // pred_fallthru
          _
      $region32: #{tpu_custom_call.1} parent=5 // pred_fallthru
        _
      %p317 = scmp.le.s32.totalorder 2, %s15
      // Predicated region
      $region41: #{tpu_custom_call.1} parent=5 // pred_check
        %p318 = pneg %p317
      $region42: #{tpu_custom_call.1} parent=5 // pred_check_branch
        %320 = sbr.rel (%p318) target = $region44
      $region43: #{tpu_custom_call.1} parent=5 // pred_region
        %s321 = ssub.s32 %s15, 2
        // Predicated region
        $region45: #{tpu_custom_call.1} parent=43 // pred_check
          %p322 = pneg %p128
        $region46: #{tpu_custom_call.1} parent=43 // pred_check_branch
          %324 = sbr.rel (%p322) target = $region48
        $region47: #{tpu_custom_call.1} parent=43 // pred_region
          %s325 = sand.u32 %s113, 1
          %s326 = scalar_lea.sflag [#allocation4], %s325
          %s327 = sand.u32 %s113, 1
          %s328 = smul.addr %s327, 8
          %s329 = scalar_lea.vmem [#allocation5], %s328
          %330 = dma.done %s326, 128
        $region48: #{tpu_custom_call.1} parent=43 // pred_fallthru
          _
      $region44: #{tpu_custom_call.1} parent=5 // pred_fallthru
        _
    $region6: #{tpu_custom_call.1} parent=1 // loop_footer
      %s19 = sadd.s32 1, %s15
    $region7: #{tpu_custom_call.1} parent=1 // loop_footer_branch
      %14 = sbr.rel target = $region3
    $region8: #{tpu_custom_call.1} parent=1 // loop_exit
      _
    %331 = vsyncpa [#allocation3], 1
    %s332 = scalar_lea.sflag [#allocation3], 1
    %333 = vsyncpa %s332, 1
    %334 = vsyncpa [#allocation4], 1
    %s335 = scalar_lea.sflag [#allocation4], 1
    %336 = vsyncpa %s335, 1

</llo_original>
